<compile_context>
chip_gen: v7x
topology: tpu7x:2x2x1
jax: 0.10.0
libtpu: 0.0.40
codegen_flags: <defaults>
</compile_context>

<pallas_src>
import functools
import math

import jax
import jax.numpy as jnp
from jax.experimental import pallas as pl
from jax.experimental.pallas import tpu as pltpu


def _round_up(v, m):
    return (v + m - 1) // m * m


def _largest_aligned_divisor(n, cap, align):
    """Largest t <= cap with t % align == 0 and n % t == 0, else None."""
    if n % align != 0 or cap < align:
        return None
    t = (min(cap, n) // align) * align
    while t >= align:
        if n % t == 0:
            return t
        t -= align
    return None


def _graphsage_kernel(adj_ref, xw_ref, b_ref, o_ref, acc_ref, *, tk, xw_resident):
    """One (row-tile i, K-tile k) grid step of  y = adj @ xw + b.

    adj_ref : (TM, TK)            bf16  adjacency tile
    xw_ref  : (TK, F_out_p) or (N_k, F_out_p)  bf16  pre-projected features
    b_ref   : (1, F_out_p)        f32   resident bias
    o_ref   : (TM, F_out_p)             output tile (written at k == last)
    acc_ref : (TM, F_out_p)       f32   VMEM accumulator
    """
    k = pl.program_id(1)

    @pl.when(k == 0)
    def _init():
        acc_ref[...] = jnp.zeros_like(acc_ref)

    if xw_resident:
        # xw is fully VMEM-resident; slice the K rows for this step.
        row = pl.multiple_of(k * tk, tk)
        xw_blk = xw_ref[pl.ds(row, tk), :]
    else:
        xw_blk = xw_ref[...]

    acc_ref[...] += jnp.dot(
        adj_ref[...], xw_blk, preferred_element_type=jnp.float32
    )

    @pl.when(k == pl.num_programs(1) - 1)
    def _finish():
        o_ref[...] = (acc_ref[...] + b_ref[...]).astype(o_ref.dtype)


def graphsage_forward(
    x,
    adj,
    weight,
    bias,
    *,
    tm=512,
    tk=2048,
    compute_dtype=jnp.bfloat16,
    out_dtype=jnp.float32,
    vmem_limit_bytes=48 * 1024 * 1024,
):
    """x: (N, F_in), adj: (N, N), weight: (F_out, F_in) [PyTorch layout], bias: (F_out,)."""
    n, f_in = x.shape
    f_out, f_in_w = weight.shape
    assert f_in_w == f_in, "weight must be (out_features, in_features)"

    itemsize = jnp.dtype(compute_dtype).itemsize
    f_out_p = _round_up(f_out, 128)  # lane-dense output / accumulator

    # ---- Tile selection: avoid materialising a padded copy of adj ----------
    # M (row) axis: multiple of 8 dividing N (pad only if N % 8 != 0).
    tm_sel = _largest_aligned_divisor(n, tm, 8)
    if tm_sel is not None:
        n_m = n
        if tm_sel == n:  # prefer >= 2 row tiles so megacore can shard rows
            half = _largest_aligned_divisor(n, n // 2, 8)
            if half is not None:
                tm_sel = half
    else:
        n_m = _round_up(n, 8)
        tm_sel = _largest_aligned_divisor(n_m, tm, 8) or n_m

    # K (reduction) axis: multiple of 128 dividing N, a full-dim block for
    # small N, or (last resort) a padded K axis.
    tk_sel = _largest_aligned_divisor(n, tk, 128)
    if tk_sel is not None:
        n_k = n
    elif n * tm_sel * itemsize <= 4 * 1024 * 1024:
        tk_sel, n_k = n, n                      # single full-width K step
    else:
        n_k = _round_up(n, 128)
        tk_sel = _largest_aligned_divisor(n_k, tk, 128) or n_k

    grid = (n_m // tm_sel, n_k // tk_sel)

    # ---- Operands ----------------------------------------------------------
    # adj: cast only (no-op if already compute_dtype); pad only if forced.
    if (n_m, n_k) != (n, n):
        adj_c = (
            jnp.zeros((n_m, n_k), compute_dtype)
            .at[:n, :n]
            .set(adj.astype(compute_dtype))
        )
    else:
        adj_c = adj.astype(compute_dtype)

    # Reassociation: xw = x @ W^T (tiny GEMM, f32), lane-padded to F_out_p.
    xw = jnp.dot(
        x.astype(jnp.float32),
        weight.astype(jnp.float32).T,
        preferred_element_type=jnp.float32,
    )
    pad_rows, pad_cols = n_k - n, f_out_p - f_out
    if pad_rows or pad_cols:
        xw = jnp.pad(xw, ((0, pad_rows), (0, pad_cols)))
    xw_c = xw.astype(compute_dtype)

    b_p = jnp.zeros((1, f_out_p), jnp.float32).at[0, :f_out].set(
        bias.astype(jnp.float32)
    )

    # Keep xw fully VMEM-resident when small (constant index_map -> fetched
    # once); otherwise stream (tk, F_out_p) tiles.
    xw_resident = n_k * f_out_p * itemsize <= 4 * 1024 * 1024
    if xw_resident:
        xw_spec = pl.BlockSpec((n_k, f_out_p), lambda i, k: (0, 0))
    else:
        xw_spec = pl.BlockSpec((tk_sel, f_out_p), lambda i, k: (k, 0))

    kernel = functools.partial(
        _graphsage_kernel, tk=tk_sel, xw_resident=xw_resident
    )

    cost = pl.CostEstimate(
        flops=2 * n_m * n_k * f_out_p,
        transcendentals=0,
        bytes_accessed=(
            adj_c.size * adj_c.dtype.itemsize
            + xw_c.size * xw_c.dtype.itemsize * (1 if xw_resident else grid[0])
            + b_p.size * b_p.dtype.itemsize
            + n_m * f_out_p * jnp.dtype(out_dtype).itemsize
        ),
    )

    y_p = pl.pallas_call(
        kernel,
        out_shape=jax.ShapeDtypeStruct((n_m, f_out_p), out_dtype),
        grid_spec=pltpu.PrefetchScalarGridSpec(
            num_scalar_prefetch=0,
            grid=grid,
            in_specs=[
                pl.BlockSpec((tm_sel, tk_sel), lambda i, k: (i, k)),  # adj tile
                xw_spec,                                              # xw
                pl.BlockSpec((1, f_out_p), lambda i, k: (0, 0)),      # bias
            ],
            out_specs=pl.BlockSpec((tm_sel, f_out_p), lambda i, k: (i, 0)),
            scratch_shapes=[pltpu.VMEM((tm_sel, f_out_p), jnp.float32)],
        ),
        compiler_params=pltpu.CompilerParams(
            dimension_semantics=("parallel", "arbitrary"),
            vmem_limit_bytes=vmem_limit_bytes,
        ),
        cost_estimate=cost,
    )(adj_c, xw_c, b_p)

    # Slice off any row padding and the lane padding of F_out.
    return y_p[:n, :f_out]


def init_linear_params(key, in_features, out_features, dtype=jnp.float32):
    """Deterministic init mirroring torch.nn.Linear defaults."""
    k_w, k_b = jax.random.split(key)
    bound = 1.0 / math.sqrt(in_features)
    weight = jax.random.uniform(
        k_w, (out_features, in_features), dtype=dtype, minval=-bound, maxval=bound
    )
    bias = jax.random.uniform(
        k_b, (out_features,), dtype=dtype, minval=-bound, maxval=bound
    )
    return weight, bias


if __name__ == "__main__":
    key = jax.random.PRNGKey(0)
    k_x, k_adj, k_params = jax.random.split(key, 3)

    N, F_IN, F_OUT = 64, 32, 16

    x = jax.random.normal(k_x, (N, F_IN), dtype=jnp.float32)
    # Dense, row-normalized adjacency-like matrix.
    adj_raw = (jax.random.uniform(k_adj, (N, N)) < 0.2).astype(jnp.float32)
    adj = adj_raw / jnp.maximum(adj_raw.sum(axis=1, keepdims=True), 1.0)

    weight, bias = init_linear_params(k_params, F_IN, F_OUT)

    y = graphsage_forward(x, adj, weight, bias)
    jax.block_until_ready(y)

    # Pure-JAX f32 reference; relaxed tolerance because the kernel streams
    # adj / xw in bf16 (accumulation stays f32).
    y_ref = (adj @ x) @ weight.T + bias
    assert y.shape == (N, F_OUT)
    assert jnp.allclose(y, y_ref, atol=2e-2, rtol=2e-2), "mismatch vs reference"

    print("KERNEL_OK")
</pallas_src>

<mosaic_0001>
module attributes {stable_mosaic.version = 11 : i64} {
  func.func @_graphsage_kernel(%arg0: i32, %arg1: i32, %arg2: memref<32x64xbf16, #tpu.memory_space<vmem>>, %arg3: memref<64x128xbf16, #tpu.memory_space<vmem>>, %arg4: memref<1x128xf32, #tpu.memory_space<vmem>>, %arg5: memref<32x128xf32, #tpu.memory_space<vmem>>, %arg6: memref<32x128xf32, #tpu.memory_space<vmem>>) attributes {dimension_semantics = [#tpu.dimension_semantics<parallel>, #tpu.dimension_semantics<arbitrary>], iteration_bounds = array<i64: 2, 1>, scalar_prefetch = 0 : i64, scratch_operands = 1 : i64, tpu.core_type = #tpu.core_type<tc>, window_params = [{transform_indices = @transform_0, window_bounds = array<i64: 32, 64>}, {pipeline_mode = #tpu.pipeline_mode<synchronous>, transform_indices = @transform_1, window_bounds = array<i64: 64, 128>}, {pipeline_mode = #tpu.pipeline_mode<synchronous>, transform_indices = @transform_2, window_bounds = array<i64: 1, 128>}, {transform_indices = @transform_3, window_bounds = array<i64: 32, 128>}]} {
    %c0_i32 = arith.constant 0 : i32
    %0 = arith.cmpi eq, %arg1, %c0_i32 : i32
    %1 = arith.extui %0 : i1 to i32
    %c0_i32_0 = arith.constant 0 : i32
    %2 = arith.cmpi ne, %1, %c0_i32_0 : i32
    scf.if %2 {
      %cst_9 = arith.constant 0.000000e+00 : f32
      %15 = vector.broadcast %cst_9 : f32 to vector<32x128xf32>
      %c0_10 = arith.constant 0 : index
      %c0_11 = arith.constant 0 : index
      %16 = vector.load %arg6[%c0_10, %c0_11] : memref<32x128xf32, #tpu.memory_space<vmem>>, vector<32x128xf32>
      tpu.vector_store %arg6[%c0_10, %c0_11], %15 {strides = array<i32>} : memref<32x128xf32, #tpu.memory_space<vmem>>, vector<32x128xf32>,
    } else {
    }
    %c64_i32 = arith.constant 64 : i32
    %3 = arith.muli %arg1, %c64_i32 : i32
    %4 = tpu.assume_multiple %3, 64 : i32
    %5 = arith.index_cast %4 : i32 to index
    %c0 = arith.constant 0 : index
    %6 = vector.load %arg3[%5, %c0] : memref<64x128xbf16, #tpu.memory_space<vmem>>, vector<64x128xbf16>
    %c0_1 = arith.constant 0 : index
    %c0_2 = arith.constant 0 : index
    %7 = vector.load %arg6[%c0_1, %c0_2] : memref<32x128xf32, #tpu.memory_space<vmem>>, vector<32x128xf32>
    %c0_3 = arith.constant 0 : index
    %c0_4 = arith.constant 0 : index
    %8 = vector.load %arg2[%c0_3, %c0_4] : memref<32x64xbf16, #tpu.memory_space<vmem>>, vector<32x64xbf16>
    %cst = arith.constant dense<0.000000e+00> : vector<32x128xf32>
    %9 = tpu.matmul %8, %6, %cst {dimension_numbers = #tpu.dot_dimension_numbers<[1], [0], [0], [1], [0, 0, 1, 1], [], []>} : vector<32x64xbf16>, vector<64x128xbf16>, vector<32x128xf32> -> vector<32x128xf32>
    %10 = arith.addf %7, %9 : vector<32x128xf32>
    %c0_5 = arith.constant 0 : index
    %c0_6 = arith.constant 0 : index
    %11 = vector.load %arg6[%c0_5, %c0_6] : memref<32x128xf32, #tpu.memory_space<vmem>>, vector<32x128xf32>
    tpu.vector_store %arg6[%c0_5, %c0_6], %10 {strides = array<i32>} : memref<32x128xf32, #tpu.memory_space<vmem>>, vector<32x128xf32>,
    %c0_i32_7 = arith.constant 0 : i32
    %12 = arith.cmpi eq, %arg1, %c0_i32_7 : i32
    %13 = arith.extui %12 : i1 to i32
    %c0_i32_8 = arith.constant 0 : i32
    %14 = arith.cmpi ne, %13, %c0_i32_8 : i32
    scf.if %14 {
      %c0_9 = arith.constant 0 : index
      %c0_10 = arith.constant 0 : index
      %15 = vector.load %arg6[%c0_9, %c0_10] : memref<32x128xf32, #tpu.memory_space<vmem>>, vector<32x128xf32>
      %c0_11 = arith.constant 0 : index
      %c0_12 = arith.constant 0 : index
      %16 = vector.load %arg4[%c0_11, %c0_12] : memref<1x128xf32, #tpu.memory_space<vmem>>, vector<1x128xf32>
      %17 = vector.broadcast %16 : vector<1x128xf32> to vector<32x128xf32>
      %18 = arith.addf %15, %17 : vector<32x128xf32>
      %c0_13 = arith.constant 0 : index
      %c0_14 = arith.constant 0 : index
      %19 = vector.load %arg5[%c0_13, %c0_14] : memref<32x128xf32, #tpu.memory_space<vmem>>, vector<32x128xf32>
      tpu.vector_store %arg5[%c0_13, %c0_14], %18 {strides = array<i32>} : memref<32x128xf32, #tpu.memory_space<vmem>>, vector<32x128xf32>,
    } else {
    }
    return
  }
  func.func @transform_0(%arg0: i32, %arg1: i32) -> (i32, i32) {
    %c0_i32 = arith.constant 0 : i32
    return %arg0, %arg1 : i32, i32
  }
  func.func @transform_1(%arg0: i32, %arg1: i32) -> (i32, i32) {
    %c0_i32 = arith.constant 0 : i32
    %c0_i32_0 = arith.constant 0 : i32
    %c0_i32_1 = arith.constant 0 : i32
    return %c0_i32, %c0_i32_0 : i32, i32
  }
  func.func @transform_2(%arg0: i32, %arg1: i32) -> (i32, i32) {
    %c0_i32 = arith.constant 0 : i32
    %c0_i32_0 = arith.constant 0 : i32
    %c0_i32_1 = arith.constant 0 : i32
    return %c0_i32, %c0_i32_0 : i32, i32
  }
  func.func @transform_3(%arg0: i32, %arg1: i32) -> (i32, i32) {
    %c0_i32 = arith.constant 0 : i32
    %c0_i32_0 = arith.constant 0 : i32
    return %arg0, %c0_i32 : i32, i32
  }
}

</mosaic_0001>

<llo_original>
// kernel: tpu_custom_call.1
$region0: #{tpu_custom_call.1}
  #allocation0 [shape = 'u32[]', space=smem, size = 0x4, offset = 0x4, fixed_abs, tag = 'smem constant byte address 0x4 - core index']
  #allocation1 [shape = 'u32[144,128]{1,0:T(1,128)}', space=vmem, size = 0x12000, scoped, tag = 'internal scratch']
  #allocation2 [shape = 'f32[32,128]{1,0:T(8,128)}', space=vmem, size = 0x4000, scoped, tag = 'scratch operand']
  %s0 = inlined_call_operand.hbm [shape: bf16[64,64], index: 0, kind: input, shape index: {}]
  %s1 = inlined_call_operand.hbm [shape: bf16[64,128], index: 1, kind: input, shape index: {}]
  %s2 = inlined_call_operand.vmem [shape: f32[1,128], index: 2, kind: input, shape index: {}]
  %s3 = inlined_call_operand.hbm [shape: f32[64,128], index: 3, kind: output, shape index: {}]
  %s4 = sld [smem:[#allocation0]]
  $region61: #{tpu_custom_call.1} parent=0
    _
  %s6 = ssub.s32 1, %s4
  %s7 = scalar_select 0, %s6, %s4
  $region1: #{tpu_custom_call.1} parent=0
    #allocation3 [shape = 'u8[16384]{0}', space=vmem, size = 0x4000, scoped, tag = 'input window, operand 0']
    #allocation4 [shape = 's32[2]{0}', space=sflag, size = 0x8, scoped, tag = 'scoped memory for tpu_custom_call.1']
    #allocation5 [shape = 's32[2]{0}', space=sflag, size = 0x8, scoped, tag = 'scoped memory for tpu_custom_call.1']
    #allocation6 [shape = 'u8[16384]{0}', space=vmem, size = 0x4000, scoped, tag = 'input window, operand 1, single buffered']
    #allocation7 [shape = 's32[1]{0}', space=sflag, size = 0x4, scoped, tag = 'scoped memory for tpu_custom_call.1']
    #allocation8 [shape = 'u8[32768]{0}', space=vmem, size = 0x8000, scoped, tag = 'output window, operand 0']
    %8 = vsyncpa [#allocation4], 0
    %s9 = scalar_lea.sflag [#allocation4], 1
    %10 = vsyncpa %s9, 0
    %11 = vsyncpa [#allocation7], 0
    %12 = vsyncpa [#allocation5], 0
    %s13 = scalar_lea.sflag [#allocation5], 1
    %14 = vsyncpa %s13, 0
    loop: start=0, step=1, limit=4
    $region2: #{tpu_custom_call.1} parent=1 // loop_pre_header
      _
    $region3: #{tpu_custom_call.1} parent=1 // loop_header
      %s16 = sphi 0, %s20
      %p17 = scmp.ge.s32.totalorder %s16, 4
      %s23 = sphi 0, %s35
      %s24 = sphi 0, %s31
      %s25 = sphi 0, %s23
      %s26 = sphi 0, %s24
      %s27 = sphi 0, %s25
      %s28 = sphi 0, %s26
      %s40 = sphi 0, %s42
      %s43 = sphi 0, %s40
      %s44 = sphi 0, %s43
      %s60 = sphi 0, %s44
      %s64 = sphi 0, %s64
      %s66 = sphi 0, %s64
      %s67 = sphi 0, %s66
      %s81 = sphi 0, %s67
      %s85 = sphi 0, %s85
      %s87 = sphi 0, %s85
      %s88 = sphi 0, %s87
      %s102 = sphi 0, %s88
      %s108 = sphi 0, %s110
      %s111 = sphi 0, %s108
      %s112 = sphi 0, %s111
      %s128 = sphi 0, %s112
    $region4: #{tpu_custom_call.1} parent=1 // loop_header_branch
      %19 = sbr.rel (%p17) target = $region8
    $region5: #{tpu_custom_call.1} parent=1 // loop_body
      %s21 = ssub.s32 %s16, 1
      %s22 = ssub.s32 %s16, 2
      %s29 = sadd.s32 1, %s24
      %p30 = scmp.ge.s32.totalorder %s29, 1
      %s31 = scalar_select %p30, 0, %s29
      %s32 = sadd.s32 1, %s23
      %s33 = scalar_select %p30, %s32, %s23
      %p34 = scmp.ge.s32.totalorder %s33, 2
      %s35 = scalar_select %p34, 0, %s33
      %s36 = ssub.s32 %s23, %s35
      %s37 = ssub.s32 %s24, %s31
      %s38 = sor.u32 %s36, %s37
      %p39 = scmp.eq.s32.totalorder %s38, 0
      %s41 = sadd.s32 %s40, 1
      %s42 = scalar_select %p39, %s40, %s41
      %p45 = pneg %p39
      %p46 = scmp.eq.s32.totalorder %s16, 1
      %p47 = por %p45, %p46
      %p48 = scmp.ne.s32.totalorder %s40, %s43
      %p49 = scmp.eq.s32.totalorder %s16, 0
      %p50 = por %p48, %p49
      %p51 = scmp.ne.s32.totalorder %s40, %s43
      %p52 = scmp.eq.s32.totalorder %s21, 1
      %p53 = por %p51, %p52
      %p54 = scmp.ne.s32.totalorder %s43, %s44
      %p55 = scmp.eq.s32.totalorder %s21, 0
      %p56 = por %p54, %p55
      %p57 = scmp.ne.s32.totalorder %s43, %s44
      %p58 = scmp.eq.s32.totalorder %s22, 1
      %p59 = por %p57, %p58
      %p61 = scmp.ne.s32.totalorder %s44, %s60
      %p62 = scmp.eq.s32.totalorder %s22, 0
      %p63 = por %p61, %p62
      %s65 = sadd.s32 %s64, 1
      %p68 = scmp.eq.s32.totalorder %s16, 1
      %p69 = scmp.ne.s32.totalorder %s64, %s66
      %p70 = scmp.eq.s32.totalorder %s16, 0
      %p71 = por %p69, %p70
      %p72 = scmp.ne.s32.totalorder %s64, %s66
      %p73 = scmp.eq.s32.totalorder %s21, 1
      %p74 = por %p72, %p73
      %p75 = scmp.ne.s32.totalorder %s66, %s67
      %p76 = scmp.eq.s32.totalorder %s21, 0
      %p77 = por %p75, %p76
      %p78 = scmp.ne.s32.totalorder %s66, %s67
      %p79 = scmp.eq.s32.totalorder %s22, 1
      %p80 = por %p78, %p79
      %p82 = scmp.ne.s32.totalorder %s67, %s81
      %p83 = scmp.eq.s32.totalorder %s22, 0
      %p84 = por %p82, %p83
      %s86 = sadd.s32 %s85, 1
      %p89 = scmp.eq.s32.totalorder %s16, 1
      %p90 = scmp.ne.s32.totalorder %s85, %s87
      %p91 = scmp.eq.s32.totalorder %s16, 0
      %p92 = por %p90, %p91
      %p93 = scmp.ne.s32.totalorder %s85, %s87
      %p94 = scmp.eq.s32.totalorder %s21, 1
      %p95 = por %p93, %p94
      %p96 = scmp.ne.s32.totalorder %s87, %s88
      %p97 = scmp.eq.s32.totalorder %s21, 0
      %p98 = por %p96, %p97
      %p99 = scmp.ne.s32.totalorder %s87, %s88
      %p100 = scmp.eq.s32.totalorder %s22, 1
      %p101 = por %p99, %p100
      %p103 = scmp.ne.s32.totalorder %s88, %s102
      %p104 = scmp.eq.s32.totalorder %s22, 0
      %p105 = por %p103, %p104
      %s106 = ssub.s32 %s23, %s35
      %p107 = scmp.eq.s32.totalorder %s106, 0
      %s109 = sadd.s32 %s108, 1
      %s110 = scalar_select %p107, %s108, %s109
      %p113 = pneg %p107
      %p114 = scmp.eq.s32.totalorder %s16, 1
      %p115 = por %p113, %p114
      %p116 = scmp.ne.s32.totalorder %s108, %s111
      %p117 = scmp.eq.s32.totalorder %s16, 0
      %p118 = por %p116, %p117
      %p119 = scmp.ne.s32.totalorder %s108, %s111
      %p120 = scmp.eq.s32.totalorder %s21, 1
      %p121 = por %p119, %p120
      %p122 = scmp.ne.s32.totalorder %s111, %s112
      %p123 = scmp.eq.s32.totalorder %s21, 0
      %p124 = por %p122, %p123
      %p125 = scmp.ne.s32.totalorder %s111, %s112
      %p126 = scmp.eq.s32.totalorder %s22, 1
      %p127 = por %p125, %p126
      %p129 = scmp.ne.s32.totalorder %s112, %s128
      %p130 = scmp.eq.s32.totalorder %s22, 0
      %p131 = por %p129, %p130
      %p132 = scmp.le.s32.totalorder 1, %s16
      %p133 = scmp.lt.s32.totalorder %s16, 3
      %p134 = pnand %p132, %p133
      %p135 = pneg %p134
      // Predicated region
      $region9: #{tpu_custom_call.1} parent=5 // pred_check
        _
      $region10: #{tpu_custom_call.1} parent=5 // pred_check_branch
        %137 = sbr.rel (%p134) target = $region12
      $region11: #{tpu_custom_call.1} parent=5 // pred_region
        %s138 = ssub.s32 %s16, 1
        // Predicated region
        $region13: #{tpu_custom_call.1} parent=11 // pred_check
          %p139 = pneg %p77
        $region14: #{tpu_custom_call.1} parent=11 // pred_check_branch
          %141 = sbr.rel (%p139) target = $region16
        $region15: #{tpu_custom_call.1} parent=11 // pred_region
          %s143 = ssub.s32 512, 512
          %144 = vsyncadd [#allocation7], %s143
          %s145 = sshll.u32 [#allocation6], 4
          %s146 = int_to_ptr.vmem [resolvable:$true] %s145
          %151 = dma.hbm_to_vmem [thread:$0]  %s1, 512, %s146, [#allocation7], 64, 64, 4
        $region16: #{tpu_custom_call.1} parent=11 // pred_fallthru
          _
        // Predicated region
        $region17: #{tpu_custom_call.1} parent=11 // pred_check
          %p152 = pneg %p98
        $region18: #{tpu_custom_call.1} parent=11 // pred_check_branch
          %154 = sbr.rel (%p152) target = $region20
        $region19: #{tpu_custom_call.1} parent=11 // pred_region
          _
        $region20: #{tpu_custom_call.1} parent=11 // pred_fallthru
          _
      $region12: #{tpu_custom_call.1} parent=5 // pred_fallthru
        _
      %p155 = scmp.lt.s32.totalorder %s16, 2
      // Predicated region
      $region21: #{tpu_custom_call.1} parent=5 // pred_check
        %p156 = pneg %p155
      $region22: #{tpu_custom_call.1} parent=5 // pred_check_branch
        %158 = sbr.rel (%p156) target = $region24
      $region23: #{tpu_custom_call.1} parent=5 // pred_region
        // Predicated region
        $region25: #{tpu_custom_call.1} parent=23 // pred_check
          %p159 = pneg %p50
        $region26: #{tpu_custom_call.1} parent=23 // pred_check_branch
          %161 = sbr.rel (%p159) target = $region28
        $region27: #{tpu_custom_call.1} parent=23 // pred_region
          %s162 = sand.u32 %s40, 1
          %s163 = scalar_lea.sflag [#allocation4], %s162
          %s164 = sand.u32 %s40, 1
          %s165 = smul.addr %s164, 16
          %s166 = scalar_lea.vmem [#allocation3], %s165
          %s167 = smul.u32 4, %s23
          %s169 = ssub.s32 256, 256
          %170 = vsyncadd %s163, %s169
          %s171 = sadd.s32 %s24, %s167
          %s172 = smul.addr %s171, 64
          %s173 = scalar_lea.hbm %s0, %s172
          %s174 = sshll.u32 %s166, 4
          %s175 = int_to_ptr.vmem [resolvable:$true] %s174
          %180 = dma.hbm_to_vmem [thread:$0]  %s173, 256, %s175, %s163, 64, 64, 4
        $region28: #{tpu_custom_call.1} parent=23 // pred_fallthru
          _
      $region24: #{tpu_custom_call.1} parent=5 // pred_fallthru
        _
      %p181 = scmp.le.s32.totalorder 1, %s16
      %p182 = scmp.lt.s32.totalorder %s16, 3
      %p183 = pnand %p181, %p182
      %p184 = pneg %p183
      // Predicated region
      $region29: #{tpu_custom_call.1} parent=5 // pred_check
        _
      $region30: #{tpu_custom_call.1} parent=5 // pred_check_branch
        %186 = sbr.rel (%p183) target = $region32
      $region31: #{tpu_custom_call.1} parent=5 // pred_region
        %s187 = ssub.s32 %s16, 1
        %s188 = sand.u32 %s43, 1
        %s189 = scalar_lea.sflag [#allocation4], %s188
        %s190 = sand.u32 %s43, 1
        %s191 = smul.addr %s190, 16
        %s192 = scalar_lea.vmem [#allocation3], %s191
        // Predicated region
        $region33: #{tpu_custom_call.1} parent=31 // pred_check
          %p193 = pneg %p56
        $region34: #{tpu_custom_call.1} parent=31 // pred_check_branch
          %195 = sbr.rel (%p193) target = $region36
        $region35: #{tpu_custom_call.1} parent=31 // pred_region
          %196 = dma.done %s189, 256
        $region36: #{tpu_custom_call.1} parent=31 // pred_fallthru
          _
        // Predicated region
        $region37: #{tpu_custom_call.1} parent=31 // pred_check
          %p197 = pneg %p77
        $region38: #{tpu_custom_call.1} parent=31 // pred_check_branch
          %199 = sbr.rel (%p197) target = $region40
        $region39: #{tpu_custom_call.1} parent=31 // pred_region
          %200 = dma.done [#allocation7], 512
        $region40: #{tpu_custom_call.1} parent=31 // pred_fallthru
          _
        %s201 = sand.u32 %s43, 1
        %s202 = scalar_lea.sflag [#allocation4], %s201
        %s203 = sand.u32 %s43, 1
        %s204 = smul.addr %s203, 16
        %s205 = scalar_lea.vmem [#allocation3], %s204
        %p206 = pneg %p56
        %p207 = pneg %p53
        %p208 = pneg %p77
        %p209 = pneg %p74
        %p210 = pneg %p98
        %p211 = pneg %p95
        %p212 = pneg %p124
        %p213 = pneg %p121
        %s214 = sand.u32 %s111, 1
        %s215 = scalar_lea.sflag [#allocation5], %s214
        %s216 = sand.u32 %s111, 1
        %s217 = smul.addr %s216, 32
        %s218 = scalar_lea.vmem [#allocation8], %s217
        %s219 = smul.u32 4, %s25
        %s220 = smul.u32 4, %s25
        %p222 = scmp.eq.s32.totalorder %s26, 0
        // Predicated region
        $region41: #{tpu_custom_call.1} parent=31 // pred_check
          %p223 = pneg %p222
        $region42: #{tpu_custom_call.1} parent=31 // pred_check_branch
          %225 = sbr.rel (%p223) target = $region44
        $region43: #{tpu_custom_call.1} parent=31 // pred_region
          %226 = vst [vmem:[#allocation2] sm:$0xff] 0.0
          %227 = vst [vmem:[#allocation2 + $0x8] sm:$0xff] 0.0
          %228 = vst [vmem:[#allocation2 + $0x10] sm:$0xff] 0.0
          %229 = vst [vmem:[#allocation2 + $0x18] sm:$0xff] 0.0
        $region44: #{tpu_custom_call.1} parent=31 // pred_fallthru
          _
        %s230 = smul.u32 %s26, 64
        %s231 = sshra.s32 %s230, 3
        %s232 = sand.u32 %s230, 7
        %s233 = smul.addr %s231, 4
        %s234 = scalar_lea.vmem [#allocation6], %s233
        %v235 = vld [vmem:[%s234] sm:$0xf]
        %v236 = vld [vmem:[%s234 + $0x4] sm:$0xf]
        %v237 = vld [vmem:[%s234 + $0x8] sm:$0xf]
        %v238 = vld [vmem:[%s234 + $0xc] sm:$0xf]
        %v239 = vld [vmem:[%s234 + $0x10] sm:$0xf]
        %v240 = vld [vmem:[%s234 + $0x14] sm:$0xf]
        %v241 = vld [vmem:[%s234 + $0x18] sm:$0xf]
        %v242 = vld [vmem:[%s234 + $0x1c] sm:$0xf]
        %v243 = vld [vmem:[#allocation2] sm:$0xff]
        %v244 = vld [vmem:[#allocation2 + $0x8] sm:$0xff]
        %v245 = vld [vmem:[#allocation2 + $0x10] sm:$0xff]
        %v246 = vld [vmem:[#allocation2 + $0x18] sm:$0xff]
        %v247 = vld [vmem:[%s192] sm:$0xf]
        %v248 = vld [vmem:[%s192 + $0x4] sm:$0xf]
        %v249 = vld [vmem:[%s192 + $0x8] sm:$0xf]
        %v250 = vld [vmem:[%s192 + $0xc] sm:$0xf]
        %v255 = vunpack.c.l.b16 %v247
        %v256 = vunpack.c.l.b16 %v248
        %v257 = vunpack.c.l.b16 %v249
        %v258 = vunpack.c.l.b16 %v250
        %v259 = vpack.c.b16 %v256, %v255
        %v260 = vpack.c.b16 %v258, %v257
        %v269 = vunpack.c.l.b16 %v235
        %v270 = vunpack.c.l.b16 %v236
        %v271 = vunpack.c.l.b16 %v237
        %v272 = vunpack.c.l.b16 %v238
        %v273 = vunpack.c.l.b16 %v239
        %v274 = vunpack.c.l.b16 %v240
        %v275 = vunpack.c.l.b16 %v241
        %v276 = vunpack.c.l.b16 %v242
        %v277 = vpack.c.b16 %v270, %v269
        %v278 = vpack.c.b16 %v272, %v271
        %v279 = vpack.c.b16 %v274, %v273
        %v280 = vpack.c.b16 %v276, %v275
        %vm285 = vcmask 523264
        %v287 = vsel %vm285, %v259, 0
        %v290 = vsel %vm285, %v260, 0
        %292 = vmatprep.subr.bf16.mxu0 0
        %293 = vmatpush1.bf16.msra.mxu0 %v277
        %294 = vmatprep.subr.bf16.mxu0 0
        %295 = vmatpush1.bf16.msra.mxu0 %v278
        %296 = vmatprep.subr.bf16.mxu0 0
        %297 = vmatpush1.bf16.msra.mxu0 %v279
        %298 = vmatprep.subr.bf16.mxu0 0
        %299 = vmatpush1.bf16.msra.mxu0 %v280
        %300 = vmatprep.subr.bf16.mxu0 0
        %301 = vmatpush1.bf16.msra.mxu0 0
        %302 = vmatprep.subr.bf16.mxu0 0
        %303 = vmatpush1.bf16.msra.mxu0 0
        %304 = vmatprep.subr.bf16.mxu0 0
        %305 = vmatpush1.bf16.msra.mxu0 0
        %306 = vmatprep.subr.bf16.mxu0 0
        %307 = vmatpush1.bf16.msra.mxu0 0
        %308 = vmatprep.subr.bf16.mxu0 0
        %309 = vmatpush1.bf16.msra.mxu0 0
        %310 = vmatprep.subr.bf16.mxu0 0
        %311 = vmatpush1.bf16.msra.mxu0 0
        %312 = vmatprep.subr.bf16.mxu0 0
        %313 = vmatpush1.bf16.msra.mxu0 0
        %314 = vmatprep.subr.bf16.mxu0 0
        %315 = vmatpush1.bf16.msra.mxu0 0
        %316 = vmatprep.subr.bf16.mxu0 0
        %317 = vmatpush1.bf16.msra.mxu0 0
        %318 = vmatprep.subr.bf16.mxu0 0
        %319 = vmatpush1.bf16.msra.mxu0 0
        %320 = vmatprep.subr.bf16.mxu0 0
        %321 = vmatpush1.bf16.msra.mxu0 0
        %322 = vmatprep.subr.bf16.mxu0 0
        %323 = vmatpush1.bf16.msra.mxu0 0
        %324 = vmatprep.mubr.bf16.mxu0 0
        %325 = vmatmul.mubr.bf16.gmra.mrb[0].mxu0 %v287
        %v326 = vpop.f32.mrb[0].mxu0
        %v327 = vadd.f32 0.0, %v326
        %v328 = vpop.f32.mrb[0].mxu0
        %v329 = vpop.f32.mrb[0].mxu0
        %v330 = vadd.f32 0.0, %v329
        %v331 = vpop.f32.mrb[0].mxu0
        %332 = vmatprep.mubr.bf16.mxu0 0
        %333 = vmatmul.mubr.bf16.gmra.mrb[0].mxu0 %v290
        %v334 = vpop.f32.mrb[0].mxu0
        %v335 = vadd.f32 0.0, %v334
        %v336 = vpop.f32.mrb[0].mxu0
        %v337 = vpop.f32.mrb[0].mxu0
        %v338 = vadd.f32 0.0, %v337
        %v339 = vpop.f32.mrb[0].mxu0
        %340 = vdwg.mxu0
        %v341 = vadd.f32 %v243, %v327
        %v342 = vadd.f32 %v244, %v330
        %v343 = vadd.f32 %v245, %v335
        %v344 = vadd.f32 %v246, %v338
        %345 = vst [vmem:[#allocation2] sm:$0xff] %v341
        %346 = vst [vmem:[#allocation2 + $0x8] sm:$0xff] %v342
        %347 = vst [vmem:[#allocation2 + $0x10] sm:$0xff] %v343
        %348 = vst [vmem:[#allocation2 + $0x18] sm:$0xff] %v344
        // Predicated region
        $region45: #{tpu_custom_call.1} parent=31 // pred_check
          %p349 = pneg %p222
        $region46: #{tpu_custom_call.1} parent=31 // pred_check_branch
          %351 = sbr.rel (%p349) target = $region48
        $region47: #{tpu_custom_call.1} parent=31 // pred_region
          %v352 = vld [vmem:[#allocation2] sm:$0xff]
          %v353 = vld [vmem:[#allocation2 + $0x8] sm:$0xff]
          %v354 = vld [vmem:[#allocation2 + $0x10] sm:$0xff]
          %v355 = vld [vmem:[#allocation2 + $0x18] sm:$0xff]
          %v356 = vld [vmem:[%s2] sm:$0x1]
          %v358 = vlaneseq
          %v359 = vshrl.u32 %v358, 7
          %v360 = vsub.s32 0, %v359
          %v361 = vrot.slane %v356, %v360
          %v363 = vadd.f32 %v352, %v361
          %v364 = vadd.f32 %v353, %v361
          %v365 = vadd.f32 %v354, %v361
          %v366 = vadd.f32 %v355, %v361
          %367 = vst [vmem:[%s218] sm:$0xff] %v363
          %368 = vst [vmem:[%s218 + $0x8] sm:$0xff] %v364
          %369 = vst [vmem:[%s218 + $0x10] sm:$0xff] %v365
          %370 = vst [vmem:[%s218 + $0x18] sm:$0xff] %v366
        $region48: #{tpu_custom_call.1} parent=31 // pred_fallthru
          _
        %s371 = sand.u32 %s111, 1
        %s372 = scalar_lea.sflag [#allocation5], %s371
        %s373 = sand.u32 %s111, 1
        %s374 = smul.addr %s373, 32
        %s375 = scalar_lea.vmem [#allocation8], %s374
        // Predicated region
        $region49: #{tpu_custom_call.1} parent=31 // pred_check
          %p376 = pneg %p121
        $region50: #{tpu_custom_call.1} parent=31 // pred_check_branch
          %378 = sbr.rel (%p376) target = $region52
        $region51: #{tpu_custom_call.1} parent=31 // pred_region
          %s379 = smul.u32 4, %s25
          %s381 = ssub.s32 512, 512
          %382 = vsyncadd %s372, %s381
          %s383 = smul.addr %s379, 128
          %s384 = scalar_lea.hbm %s3, %s383
          %s385 = sshll.u32 %s375, 4
          %s386 = int_to_ptr.vmem [resolvable:$true] %s385
          %391 = dma.vmem_to_hbm [thread:$0]  %s386, 512, %s384, %s372, 128, 128, 8
        $region52: #{tpu_custom_call.1} parent=31 // pred_fallthru
          _
      $region32: #{tpu_custom_call.1} parent=5 // pred_fallthru
        _
      %p392 = scmp.le.s32.totalorder 2, %s16
      // Predicated region
      $region53: #{tpu_custom_call.1} parent=5 // pred_check
        %p393 = pneg %p392
      $region54: #{tpu_custom_call.1} parent=5 // pred_check_branch
        %395 = sbr.rel (%p393) target = $region56
      $region55: #{tpu_custom_call.1} parent=5 // pred_region
        %s396 = ssub.s32 %s16, 2
        // Predicated region
        $region57: #{tpu_custom_call.1} parent=55 // pred_check
          %p397 = pneg %p127
        $region58: #{tpu_custom_call.1} parent=55 // pred_check_branch
          %399 = sbr.rel (%p397) target = $region60
        $region59: #{tpu_custom_call.1} parent=55 // pred_region
          %s400 = sand.u32 %s112, 1
          %s401 = scalar_lea.sflag [#allocation5], %s400
          %s402 = sand.u32 %s112, 1
          %s403 = smul.addr %s402, 32
          %s404 = scalar_lea.vmem [#allocation8], %s403
          %405 = dma.done %s401, 512
        $region60: #{tpu_custom_call.1} parent=55 // pred_fallthru
          _
      $region56: #{tpu_custom_call.1} parent=5 // pred_fallthru
        _
    $region6: #{tpu_custom_call.1} parent=1 // loop_footer
      %s20 = sadd.s32 1, %s16
    $region7: #{tpu_custom_call.1} parent=1 // loop_footer_branch
      %15 = sbr.rel target = $region3
    $region8: #{tpu_custom_call.1} parent=1 // loop_exit
      _
    %406 = vsyncpa [#allocation4], 1
    %s407 = scalar_lea.sflag [#allocation4], 1
    %408 = vsyncpa %s407, 1
    %409 = vsyncpa [#allocation7], 1
    %410 = vsyncpa [#allocation5], 1
    %s411 = scalar_lea.sflag [#allocation5], 1
    %412 = vsyncpa %s411, 1

</llo_original>
